<compile_context>
chip_gen: v7x
topology: tpu7x:2x2x1
jax: 0.10.0
libtpu: 0.0.40
codegen_flags: <defaults>
</compile_context>

<pallas_src>
import functools

import jax
import jax.numpy as jnp
from jax.experimental import pallas as pl
from jax.experimental.pallas import tpu as pltpu


def _round_up(x, m):
    return ((x + m - 1) // m) * m


def system_net_kernel(s_ref, a_ref, w1s_ref, w1a_ref, b1_ref,
                      w2_ref, b2_ref, w3_ref, b3_ref, out_ref):
    cd = w1s_ref.dtype  # MXU operand dtype (bf16 in the default config, f32 optional)

    # fc1 on split [state | action] operands: two short MXU pushes (K=S and K=A)
    # replace the wrapper-side torch.cat (fc1 is <10% of MXU work, so this is free,
    # and it removes an extra XLA launch + HBM materialization of xa).
    x1 = (jnp.dot(s_ref[...].astype(cd), w1s_ref[...],
                  preferred_element_type=jnp.float32)
          + jnp.dot(a_ref[...].astype(cd), w1a_ref[...],
                    preferred_element_type=jnp.float32)
          + b1_ref[...])
    x1 = jnp.maximum(x1, 0.0)                               # ReLU (f32 on VPU)
    # TODO(synk): optional nn.LayerNorm(fc1_dims/fc2_dims) (ln=True ctor flag) not
    # implemented; wrapper raises for ln=True so it fails loudly.

    # fc2 — feed the MXU in the weights' dtype, accumulate in f32.
    x2 = jnp.dot(x1.astype(cd), w2_ref[...],
                 preferred_element_type=jnp.float32) + b2_ref[...]
    x2 = jnp.maximum(x2, 0.0)                               # ReLU (f32)

    # fc3 (no activation); narrow (or optionally lane-padded) output block.
    out = jnp.dot(x2.astype(cd), w3_ref[...],
                  preferred_element_type=jnp.float32) + b3_ref[...]
    out_ref[...] = out.astype(out_ref.dtype)


def prepare_params(params, state_dim, *, compute_dtype=jnp.bfloat16,
                   lane_pad_output=False):
    """One-time weight preparation (hoisted off the per-call hot path).

    Splits fc1's weight into state/action halves (fc1(cat(s,a)) == s@w1[:S] + a@w1[S:] + b1),
    casts matmul weights to `compute_dtype`, keeps biases in f32, and optionally zero-pads
    fc3 to a 128-wide (lane-dense, unmasked-vst) output block for benchmarking.
    """
    w1, b1 = params["w1"], params["b1"]
    w2, b2 = params["w2"], params["b2"]
    w3, b3 = params["w3"], params["b3"]
    S = state_dim

    w3p, b3p = w3, b3
    if lane_pad_output:
        out_pad = _round_up(w3.shape[1], 128)
        w3p = jnp.zeros((w3.shape[0], out_pad), w3.dtype).at[:, :w3.shape[1]].set(w3)
        b3p = jnp.zeros((1, out_pad), b3.dtype).at[:, :b3.shape[1]].set(b3)

    return {
        "w1s": w1[:S].astype(compute_dtype),
        "w1a": w1[S:].astype(compute_dtype),
        "b1": b1.astype(jnp.float32),
        "w2": w2.astype(compute_dtype),
        "b2": b2.astype(jnp.float32),
        "w3": w3p.astype(compute_dtype),
        "b3": b3p.astype(jnp.float32),
    }


@functools.partial(jax.jit, static_argnames=("ln", "out_dtype", "block_batch"))
def system_network_forward(state, action, prepared, *, ln=False,
                           out_dtype=jnp.bfloat16, block_batch=2048):
    """Pallas forward: state [B, S], action [B, A] -> next-state prediction [B, S]."""
    if ln:
        # TODO(synk): LayerNorm path (ln=True) not implemented in the kernel.
        raise NotImplementedError("SystemNetwork Pallas kernel only supports ln=False")

    B, S = state.shape
    _, A = action.shape
    w1s, w1a = prepared["w1s"], prepared["w1a"]
    w2, w3 = prepared["w2"], prepared["w3"]
    b1, b2, b3 = prepared["b1"], prepared["b2"], prepared["b3"]
    assert w1s.shape[0] == S and w1a.shape[0] == A
    F1 = w1s.shape[1]
    F2 = w2.shape[1]
    OUT = w3.shape[1]          # == S (narrow) or round_up(S, 128) (lane-padded variant)

    # Batch tile: multiple of 8 sublanes; aim for >=2 grid steps (so "parallel" can
    # shard across v7x's 2 TensorCores) while capping at block_batch so very large
    # batches keep big tiles (v5e/v6e roofline) without blowing v7x's smaller VMEM.
    B8 = _round_up(B, 8)
    half = _round_up((B8 + 1) // 2, 8)
    TB = max(8, min(_round_up(block_batch, 8), half))
    Bp = _round_up(B8, TB)
    if Bp != B:
        state = jnp.pad(state, ((0, Bp - B), (0, 0)))
        action = jnp.pad(action, ((0, Bp - B), (0, 0)))

    out = pl.pallas_call(
        system_net_kernel,
        out_shape=jax.ShapeDtypeStruct((Bp, OUT), out_dtype),
        grid=(Bp // TB,),
        in_specs=[
            pl.BlockSpec((TB, S), lambda i: (i, 0)),     # state: streamed per tile
            pl.BlockSpec((TB, A), lambda i: (i, 0)),     # action: streamed per tile
            pl.BlockSpec((S, F1), lambda i: (0, 0)),     # w1[:S]  (VMEM-resident)
            pl.BlockSpec((A, F1), lambda i: (0, 0)),     # w1[S:]
            pl.BlockSpec((1, F1), lambda i: (0, 0)),     # b1
            pl.BlockSpec((F1, F2), lambda i: (0, 0)),    # w2
            pl.BlockSpec((1, F2), lambda i: (0, 0)),     # b2
            pl.BlockSpec((F2, OUT), lambda i: (0, 0)),   # w3
            pl.BlockSpec((1, OUT), lambda i: (0, 0)),    # b3
        ],
        out_specs=pl.BlockSpec((TB, OUT), lambda i: (i, 0)),
        compiler_params=pltpu.CompilerParams(
            dimension_semantics=("parallel",)),          # shard batch across TCs (v7x)
    )(state, action, w1s, w1a, b1, w2, b2, w3, b3)

    if Bp != B or OUT != S:
        out = out[:B, :S]
    return out


def init_params(key, state_dim, n_actions, fc1_dims, fc2_dims):
    """Deterministic init mimicking nn.Linear's U(-1/sqrt(fan_in), 1/sqrt(fan_in))."""
    def linear(k, fan_in, fan_out):
        kw, kb = jax.random.split(k)
        bound = 1.0 / jnp.sqrt(fan_in)
        w = jax.random.uniform(kw, (fan_in, fan_out), jnp.float32, -bound, bound)
        b = jax.random.uniform(kb, (1, fan_out), jnp.float32, -bound, bound)
        return w, b

    k1, k2, k3 = jax.random.split(key, 3)
    w1, b1 = linear(k1, state_dim + n_actions, fc1_dims)
    w2, b2 = linear(k2, fc1_dims, fc2_dims)
    w3, b3 = linear(k3, fc2_dims, state_dim)
    return {"w1": w1, "b1": b1, "w2": w2, "b2": b2, "w3": w3, "b3": b3}


def reference_forward(state, action, params, compute_dtype=jnp.float32,
                      out_dtype=jnp.float32):
    """Pure-JAX reference mirroring the kernel's dtype handling."""
    xa = jnp.concatenate([state, action], axis=1).astype(compute_dtype)
    w1 = params["w1"].astype(compute_dtype)
    w2 = params["w2"].astype(compute_dtype)
    w3 = params["w3"].astype(compute_dtype)
    x1 = jnp.maximum(jnp.dot(xa, w1, preferred_element_type=jnp.float32)
                     + params["b1"], 0.0)
    x2 = jnp.maximum(jnp.dot(x1.astype(compute_dtype), w2,
                             preferred_element_type=jnp.float32) + params["b2"], 0.0)
    out = (jnp.dot(x2.astype(compute_dtype), w3,
                   preferred_element_type=jnp.float32) + params["b3"])
    return out.astype(out_dtype)


if __name__ == "__main__":
    # Small shapes consistent with the module: input_dims=[8], n_actions=4,
    # fc1_dims=fc2_dims=128, batch=8.
    B, S, A, F1, F2 = 8, 8, 4, 128, 128

    key = jax.random.PRNGKey(0)
    kp, ks, ka = jax.random.split(key, 3)
    params = init_params(kp, S, A, F1, F2)
    state = jax.random.normal(ks, (B, S), jnp.float32)
    action = jax.random.normal(ka, (B, A), jnp.float32)

    ref_f32 = reference_forward(state, action, params, compute_dtype=jnp.float32)

    # 1) f32-operand path: exact-path correctness vs f32 reference.
    prep_f32 = jax.tree.map(jax.block_until_ready,
                            prepare_params(params, S, compute_dtype=jnp.float32))
    out_f32 = jax.block_until_ready(
        system_network_forward(state, action, prep_f32, out_dtype=jnp.float32))
    assert out_f32.shape == (B, S)
    assert jnp.allclose(out_f32, ref_f32, atol=1e-4, rtol=1e-4), "f32 mismatch vs reference"

    # 2) Default production path: bf16 MXU operands, narrow bf16 output store.
    prep = jax.tree.map(jax.block_until_ready, prepare_params(params, S))
    out_bf16 = jax.block_until_ready(system_network_forward(state, action, prep))
    ref_bf16 = reference_forward(state, action, params,
                                 compute_dtype=jnp.bfloat16, out_dtype=jnp.bfloat16)
    assert out_bf16.dtype == jnp.bfloat16 and out_bf16.shape == (B, S)
    assert jnp.allclose(out_bf16.astype(jnp.float32), ref_bf16.astype(jnp.float32),
                        atol=2e-2, rtol=2e-2), "bf16 mismatch vs reference"
    assert jnp.allclose(out_bf16.astype(jnp.float32), ref_f32,
                        atol=5e-2, rtol=5e-2), "bf16 drifted from f32 reference"

    # 3) Larger ragged batch: exercises batch tiling, grid > 1, and row padding.
    B2 = 70
    ks2, ka2 = jax.random.split(jax.random.PRNGKey(1))
    state2 = jax.random.normal(ks2, (B2, S), jnp.float32)
    action2 = jax.random.normal(ka2, (B2, A), jnp.float32)
    out2 = jax.block_until_ready(
        system_network_forward(state2, action2, prep, block_batch=32))
    ref2 = reference_forward(state2, action2, params,
                             compute_dtype=jnp.bfloat16, out_dtype=jnp.bfloat16)
    assert out2.shape == (B2, S)
    assert jnp.allclose(out2.astype(jnp.float32), ref2.astype(jnp.float32),
                        atol=2e-2, rtol=2e-2), "tiled-batch mismatch vs reference"

    # 4) Lane-padded (unmasked-vst) output variant — the benchmark alternative.
    prep_pad = jax.tree.map(jax.block_until_ready,
                            prepare_params(params, S, lane_pad_output=True))
    out_pad = jax.block_until_ready(system_network_forward(state, action, prep_pad))
    assert out_pad.shape == (B, S)
    assert jnp.allclose(out_pad.astype(jnp.float32), out_bf16.astype(jnp.float32),
                        atol=2e-2, rtol=2e-2), "padded-output variant mismatch"

    print("KERNEL_OK")
</pallas_src>

<mosaic_0001>
module attributes {stable_mosaic.version = 11 : i64} {
  func.func @system_net_kernel(%arg0: i32, %arg1: memref<8x8xf32, #tpu.memory_space<vmem>>, %arg2: memref<8x4xf32, #tpu.memory_space<vmem>>, %arg3: memref<8x128xf32, #tpu.memory_space<vmem>>, %arg4: memref<4x128xf32, #tpu.memory_space<vmem>>, %arg5: memref<1x128xf32, #tpu.memory_space<vmem>>, %arg6: memref<128x128xf32, #tpu.memory_space<vmem>>, %arg7: memref<1x128xf32, #tpu.memory_space<vmem>>, %arg8: memref<128x8xf32, #tpu.memory_space<vmem>>, %arg9: memref<1x8xf32, #tpu.memory_space<vmem>>, %arg10: memref<8x8xf32, #tpu.memory_space<vmem>>) attributes {dimension_semantics = [#tpu.dimension_semantics<parallel>], iteration_bounds = array<i64: 1>, scalar_prefetch = 0 : i64, scratch_operands = 0 : i64, tpu.core_type = #tpu.core_type<tc>, window_params = [{transform_indices = @transform_0, window_bounds = array<i64: 8, 8>}, {transform_indices = @transform_1, window_bounds = array<i64: 8, 4>}, {pipeline_mode = #tpu.pipeline_mode<synchronous>, transform_indices = @transform_2, window_bounds = array<i64: 8, 128>}, {pipeline_mode = #tpu.pipeline_mode<synchronous>, transform_indices = @transform_3, window_bounds = array<i64: 4, 128>}, {pipeline_mode = #tpu.pipeline_mode<synchronous>, transform_indices = @transform_4, window_bounds = array<i64: 1, 128>}, {pipeline_mode = #tpu.pipeline_mode<synchronous>, transform_indices = @transform_5, window_bounds = array<i64: 128, 128>}, {pipeline_mode = #tpu.pipeline_mode<synchronous>, transform_indices = @transform_6, window_bounds = array<i64: 1, 128>}, {pipeline_mode = #tpu.pipeline_mode<synchronous>, transform_indices = @transform_7, window_bounds = array<i64: 128, 8>}, {pipeline_mode = #tpu.pipeline_mode<synchronous>, transform_indices = @transform_8, window_bounds = array<i64: 1, 8>}, {transform_indices = @transform_9, window_bounds = array<i64: 8, 8>}]} {
    %c0 = arith.constant 0 : index
    %c0_0 = arith.constant 0 : index
    %0 = vector.load %arg1[%c0, %c0_0] : memref<8x8xf32, #tpu.memory_space<vmem>>, vector<8x8xf32>
    %c0_1 = arith.constant 0 : index
    %c0_2 = arith.constant 0 : index
    %1 = vector.load %arg3[%c0_1, %c0_2] : memref<8x128xf32, #tpu.memory_space<vmem>>, vector<8x128xf32>
    %cst = arith.constant dense<0.000000e+00> : vector<8x128xf32>
    %2 = tpu.matmul %0, %1, %cst {dimension_numbers = #tpu.dot_dimension_numbers<[1], [0], [0], [1], [0, 0, 1, 1], [], []>} : vector<8x8xf32>, vector<8x128xf32>, vector<8x128xf32> -> vector<8x128xf32>
    %c0_3 = arith.constant 0 : index
    %c0_4 = arith.constant 0 : index
    %3 = vector.load %arg2[%c0_3, %c0_4] : memref<8x4xf32, #tpu.memory_space<vmem>>, vector<8x4xf32>
    %c0_5 = arith.constant 0 : index
    %c0_6 = arith.constant 0 : index
    %4 = vector.load %arg4[%c0_5, %c0_6] : memref<4x128xf32, #tpu.memory_space<vmem>>, vector<4x128xf32>
    %cst_7 = arith.constant dense<0.000000e+00> : vector<8x128xf32>
    %5 = tpu.matmul %3, %4, %cst_7 {dimension_numbers = #tpu.dot_dimension_numbers<[1], [0], [0], [1], [0, 0, 1, 1], [], []>} : vector<8x4xf32>, vector<4x128xf32>, vector<8x128xf32> -> vector<8x128xf32>
    %6 = arith.addf %2, %5 : vector<8x128xf32>
    %c0_8 = arith.constant 0 : index
    %c0_9 = arith.constant 0 : index
    %7 = vector.load %arg5[%c0_8, %c0_9] : memref<1x128xf32, #tpu.memory_space<vmem>>, vector<1x128xf32>
    %8 = vector.broadcast %7 : vector<1x128xf32> to vector<8x128xf32>
    %9 = arith.addf %6, %8 : vector<8x128xf32>
    %cst_10 = arith.constant 0.000000e+00 : f32
    %10 = vector.broadcast %cst_10 : f32 to vector<8x128xf32>
    %11 = arith.maximumf %9, %10 : vector<8x128xf32>
    %c0_11 = arith.constant 0 : index
    %c0_12 = arith.constant 0 : index
    %12 = vector.load %arg6[%c0_11, %c0_12] : memref<128x128xf32, #tpu.memory_space<vmem>>, vector<128x128xf32>
    %cst_13 = arith.constant dense<0.000000e+00> : vector<8x128xf32>
    %13 = tpu.matmul %11, %12, %cst_13 {dimension_numbers = #tpu.dot_dimension_numbers<[1], [0], [0], [1], [0, 0, 1, 1], [], []>} : vector<8x128xf32>, vector<128x128xf32>, vector<8x128xf32> -> vector<8x128xf32>
    %c0_14 = arith.constant 0 : index
    %c0_15 = arith.constant 0 : index
    %14 = vector.load %arg7[%c0_14, %c0_15] : memref<1x128xf32, #tpu.memory_space<vmem>>, vector<1x128xf32>
    %15 = vector.broadcast %14 : vector<1x128xf32> to vector<8x128xf32>
    %16 = arith.addf %13, %15 : vector<8x128xf32>
    %cst_16 = arith.constant 0.000000e+00 : f32
    %17 = vector.broadcast %cst_16 : f32 to vector<8x128xf32>
    %18 = arith.maximumf %16, %17 : vector<8x128xf32>
    %c0_17 = arith.constant 0 : index
    %c0_18 = arith.constant 0 : index
    %19 = vector.load %arg8[%c0_17, %c0_18] : memref<128x8xf32, #tpu.memory_space<vmem>>, vector<128x8xf32>
    %cst_19 = arith.constant dense<0.000000e+00> : vector<8x8xf32>
    %20 = tpu.matmul %18, %19, %cst_19 {dimension_numbers = #tpu.dot_dimension_numbers<[1], [0], [0], [1], [0, 0, 1, 1], [], []>} : vector<8x128xf32>, vector<128x8xf32>, vector<8x8xf32> -> vector<8x8xf32>
    %c0_20 = arith.constant 0 : index
    %c0_21 = arith.constant 0 : index
    %21 = vector.load %arg9[%c0_20, %c0_21] : memref<1x8xf32, #tpu.memory_space<vmem>>, vector<1x8xf32>
    %22 = vector.broadcast %21 : vector<1x8xf32> to vector<8x8xf32>
    %23 = arith.addf %20, %22 : vector<8x8xf32>
    %c0_22 = arith.constant 0 : index
    %c0_23 = arith.constant 0 : index
    %24 = vector.load %arg10[%c0_22, %c0_23] : memref<8x8xf32, #tpu.memory_space<vmem>>, vector<8x8xf32>
    tpu.vector_store %arg10[%c0_22, %c0_23], %23 {strides = array<i32>} : memref<8x8xf32, #tpu.memory_space<vmem>>, vector<8x8xf32>,
    return
  }
  func.func @transform_0(%arg0: i32) -> (i32, i32) {
    %c0_i32 = arith.constant 0 : i32
    %c0_i32_0 = arith.constant 0 : i32
    return %arg0, %c0_i32 : i32, i32
  }
  func.func @transform_1(%arg0: i32) -> (i32, i32) {
    %c0_i32 = arith.constant 0 : i32
    %c0_i32_0 = arith.constant 0 : i32
    return %arg0, %c0_i32 : i32, i32
  }
  func.func @transform_2(%arg0: i32) -> (i32, i32) {
    %c0_i32 = arith.constant 0 : i32
    %c0_i32_0 = arith.constant 0 : i32
    %c0_i32_1 = arith.constant 0 : i32
    return %c0_i32, %c0_i32_0 : i32, i32
  }
  func.func @transform_3(%arg0: i32) -> (i32, i32) {
    %c0_i32 = arith.constant 0 : i32
    %c0_i32_0 = arith.constant 0 : i32
    %c0_i32_1 = arith.constant 0 : i32
    return %c0_i32, %c0_i32_0 : i32, i32
  }
  func.func @transform_4(%arg0: i32) -> (i32, i32) {
    %c0_i32 = arith.constant 0 : i32
    %c0_i32_0 = arith.constant 0 : i32
    %c0_i32_1 = arith.constant 0 : i32
    return %c0_i32, %c0_i32_0 : i32, i32
  }
  func.func @transform_5(%arg0: i32) -> (i32, i32) {
    %c0_i32 = arith.constant 0 : i32
    %c0_i32_0 = arith.constant 0 : i32
    %c0_i32_1 = arith.constant 0 : i32
    return %c0_i32, %c0_i32_0 : i32, i32
  }
  func.func @transform_6(%arg0: i32) -> (i32, i32) {
    %c0_i32 = arith.constant 0 : i32
    %c0_i32_0 = arith.constant 0 : i32
    %c0_i32_1 = arith.constant 0 : i32
    return %c0_i32, %c0_i32_0 : i32, i32
  }
  func.func @transform_7(%arg0: i32) -> (i32, i32) {
    %c0_i32 = arith.constant 0 : i32
    %c0_i32_0 = arith.constant 0 : i32
    %c0_i32_1 = arith.constant 0 : i32
    return %c0_i32, %c0_i32_0 : i32, i32
  }
  func.func @transform_8(%arg0: i32) -> (i32, i32) {
    %c0_i32 = arith.constant 0 : i32
    %c0_i32_0 = arith.constant 0 : i32
    %c0_i32_1 = arith.constant 0 : i32
    return %c0_i32, %c0_i32_0 : i32, i32
  }
  func.func @transform_9(%arg0: i32) -> (i32, i32) {
    %c0_i32 = arith.constant 0 : i32
    %c0_i32_0 = arith.constant 0 : i32
    return %arg0, %c0_i32 : i32, i32
  }
}

</mosaic_0001>

<llo_original>
// kernel: system_network_forward.1
$region0: #{system_network_forward.1}
  #allocation0 [shape = 'u32[]', space=smem, size = 0x4, offset = 0x4, fixed_abs, tag = 'smem constant byte address 0x4 - core index']
  #allocation1 [shape = 'u32[144,128]{1,0:T(1,128)}', space=vmem, size = 0x12000, scoped, tag = 'internal scratch']
  %s0 = inlined_call_operand.vmem [shape: f32[8,8], index: 0, kind: input, shape index: {}]
  %s1 = inlined_call_operand.vmem [shape: f32[8,4], index: 1, kind: input, shape index: {}]
  %s2 = inlined_call_operand.vmem [shape: f32[8,128], index: 2, kind: input, shape index: {}]
  %s3 = inlined_call_operand.vmem [shape: f32[4,128], index: 3, kind: input, shape index: {}]
  %s4 = inlined_call_operand.vmem [shape: f32[1,128], index: 4, kind: input, shape index: {}]
  %s5 = inlined_call_operand.vmem [shape: f32[128,128], index: 5, kind: input, shape index: {}]
  %s6 = inlined_call_operand.vmem [shape: f32[1,128], index: 6, kind: input, shape index: {}]
  %s7 = inlined_call_operand.vmem [shape: f32[128,8], index: 7, kind: input, shape index: {}]
  %s8 = inlined_call_operand.vmem [shape: f32[1,8], index: 8, kind: input, shape index: {}]
  %s9 = inlined_call_operand.hbm [shape: f32[8,8], index: 9, kind: output, shape index: {}]
  %s10 = sld [smem:[#allocation0]]
  $region46: #{system_network_forward.1} parent=0
    _
  %s12 = ssub.s32 1, %s10
  %s13 = scalar_select 0, %s12, %s10
  $region1: #{system_network_forward.1} parent=0
    #allocation2 [shape = 'u8[4096]{0}', space=vmem, size = 0x1000, scoped, tag = 'output window, operand 0, single buffered']
    #allocation3 [shape = 's32[1]{0}', space=sflag, size = 0x4, scoped, tag = 'scoped memory for system_network_forward.1']
    %14 = vsyncpa [#allocation3], 0
    // Predicated region
    $region2: #{system_network_forward.1} parent=1 // pred_check
      _
    $region3: #{system_network_forward.1} parent=1 // pred_check_branch
      %16 = sbr.rel (0) target = $region5
    $region4: #{system_network_forward.1} parent=1 // pred_region
      _
    $region5: #{system_network_forward.1} parent=1 // pred_fallthru
      _
    // Predicated region
    $region6: #{system_network_forward.1} parent=1 // pred_check
      _
    $region7: #{system_network_forward.1} parent=1 // pred_check_branch
      %18 = sbr.rel (0) target = $region9
    $region8: #{system_network_forward.1} parent=1 // pred_region
      _
    $region9: #{system_network_forward.1} parent=1 // pred_fallthru
      _
    // Predicated region
    $region10: #{system_network_forward.1} parent=1 // pred_check
      _
    $region11: #{system_network_forward.1} parent=1 // pred_check_branch
      %20 = sbr.rel (0) target = $region13
    $region12: #{system_network_forward.1} parent=1 // pred_region
      _
    $region13: #{system_network_forward.1} parent=1 // pred_fallthru
      _
    // Predicated region
    $region14: #{system_network_forward.1} parent=1 // pred_check
      _
    $region15: #{system_network_forward.1} parent=1 // pred_check_branch
      %22 = sbr.rel (0) target = $region17
    $region16: #{system_network_forward.1} parent=1 // pred_region
      _
    $region17: #{system_network_forward.1} parent=1 // pred_fallthru
      _
    // Predicated region
    $region18: #{system_network_forward.1} parent=1 // pred_check
      _
    $region19: #{system_network_forward.1} parent=1 // pred_check_branch
      %24 = sbr.rel (0) target = $region21
    $region20: #{system_network_forward.1} parent=1 // pred_region
      _
    $region21: #{system_network_forward.1} parent=1 // pred_fallthru
      _
    // Predicated region
    $region22: #{system_network_forward.1} parent=1 // pred_check
      _
    $region23: #{system_network_forward.1} parent=1 // pred_check_branch
      %26 = sbr.rel (0) target = $region25
    $region24: #{system_network_forward.1} parent=1 // pred_region
      _
    $region25: #{system_network_forward.1} parent=1 // pred_fallthru
      _
    // Predicated region
    $region26: #{system_network_forward.1} parent=1 // pred_check
      _
    $region27: #{system_network_forward.1} parent=1 // pred_check_branch
      %28 = sbr.rel (0) target = $region29
    $region28: #{system_network_forward.1} parent=1 // pred_region
      _
    $region29: #{system_network_forward.1} parent=1 // pred_fallthru
      _
    // Predicated region
    $region30: #{system_network_forward.1} parent=1 // pred_check
      _
    $region31: #{system_network_forward.1} parent=1 // pred_check_branch
      %30 = sbr.rel (0) target = $region33
    $region32: #{system_network_forward.1} parent=1 // pred_region
      _
    $region33: #{system_network_forward.1} parent=1 // pred_fallthru
      _
    // Predicated region
    $region34: #{system_network_forward.1} parent=1 // pred_check
      _
    $region35: #{system_network_forward.1} parent=1 // pred_check_branch
      %32 = sbr.rel (0) target = $region37
    $region36: #{system_network_forward.1} parent=1 // pred_region
      _
    $region37: #{system_network_forward.1} parent=1 // pred_fallthru
      _
    %v33 = vld [vmem:[%s0] sm:$0xff]
    %v34 = vld [vmem:[%s2] sm:$0xff]
    %v35 = vld [vmem:[%s1] sm:$0xff]
    %v36 = vld [vmem:[%s3] sm:$0xf]
    %vm37 = vcmask 31744
    %v39 = vsel %vm37, %v35, 0
    %vm41 = vcmask 1043456
    %v43 = vsel %vm41, %v36, 0
    %45 = vmatprep.subr.mxu0 0.0
    %46 = vmatpush1.msra.mxu0 %v43
    %47 = vmatprep.subr.mxu0 0.0
    %48 = vmatpush1.msra.mxu0 0.0
    %49 = vmatprep.subr.mxu0 0.0
    %50 = vmatpush1.msra.mxu0 0.0
    %51 = vmatprep.subr.mxu0 0.0
    %52 = vmatpush1.msra.mxu0 0.0
    %53 = vmatprep.subr.mxu0 0.0
    %54 = vmatpush1.msra.mxu0 0.0
    %55 = vmatprep.subr.mxu0 0.0
    %56 = vmatpush1.msra.mxu0 0.0
    %57 = vmatprep.subr.mxu0 0.0
    %58 = vmatpush1.msra.mxu0 0.0
    %59 = vmatprep.subr.mxu0 0.0
    %60 = vmatpush1.msra.mxu0 0.0
    %61 = vmatprep.subr.mxu0 0.0
    %62 = vmatpush1.msra.mxu0 0.0
    %63 = vmatprep.subr.mxu0 0.0
    %64 = vmatpush1.msra.mxu0 0.0
    %65 = vmatprep.subr.mxu0 0.0
    %66 = vmatpush1.msra.mxu0 0.0
    %67 = vmatprep.subr.mxu0 0.0
    %68 = vmatpush1.msra.mxu0 0.0
    %69 = vmatprep.subr.mxu0 0.0
    %70 = vmatpush1.msra.mxu0 0.0
    %71 = vmatprep.subr.mxu0 0.0
    %72 = vmatpush1.msra.mxu0 0.0
    %73 = vmatprep.subr.mxu0 0.0
    %74 = vmatpush1.msra.mxu0 0.0
    %75 = vmatprep.subr.mxu0 0.0
    %76 = vmatpush1.msra.mxu0 0.0
    %77 = vmatprep.subr.mxu0 0.0
    %78 = vmatpush1.msra.mxu0 0.0
    %79 = vmatprep.subr.mxu0 0.0
    %80 = vmatpush1.msra.mxu0 0.0
    %81 = vmatprep.subr.mxu0 0.0
    %82 = vmatpush1.msra.mxu0 0.0
    %83 = vmatprep.subr.mxu0 0.0
    %84 = vmatpush1.msra.mxu0 0.0
    %85 = vmatprep.subr.mxu0 0.0
    %86 = vmatpush1.msra.mxu0 0.0
    %87 = vmatprep.subr.mxu0 0.0
    %88 = vmatpush1.msra.mxu0 0.0
    %89 = vmatprep.subr.mxu0 0.0
    %90 = vmatpush1.msra.mxu0 0.0
    %91 = vmatprep.subr.mxu0 0.0
    %92 = vmatpush1.msra.mxu0 0.0
    %93 = vmatprep.subr.mxu0 0.0
    %94 = vmatpush1.msra.mxu0 0.0
    %95 = vmatprep.subr.mxu0 0.0
    %96 = vmatpush1.msra.mxu0 0.0
    %97 = vmatprep.subr.mxu0 0.0
    %98 = vmatpush1.msra.mxu0 0.0
    %99 = vmatprep.subr.mxu0 0.0
    %100 = vmatpush1.msra.mxu0 0.0
    %101 = vmatprep.subr.mxu0 0.0
    %102 = vmatpush1.msra.mxu0 0.0
    %103 = vmatprep.subr.mxu0 0.0
    %104 = vmatpush1.msra.mxu0 0.0
    %105 = vmatprep.subr.mxu0 0.0
    %106 = vmatpush1.msra.mxu0 0.0
    %107 = vmatprep.subr.mxu0 0.0
    %108 = vmatpush1.msra.mxu0 0.0
    %109 = vmatprep.mubr.f32.mxu0 0.0
    %110 = vmatmul.mubr.f32.gmra.mrb[0].mxu0 %v39
    %v111 = vpop.f32.mrb[0].mxu0
    %v112 = vadd.f32 0.0, %v111
    %v113 = vpop.f32.mrb[0].mxu0
    %114 = vdwg.mxu0
    %vm115 = vcmask 64512
    %v117 = vsel %vm115, %v33, 0
    %119 = vmatprep.subr.mxu0 0.0
    %120 = vmatpush1.msra.mxu0 %v34
    %121 = vmatprep.subr.mxu0 0.0
    %122 = vmatpush1.msra.mxu0 0.0
    %123 = vmatprep.subr.mxu0 0.0
    %124 = vmatpush1.msra.mxu0 0.0
    %125 = vmatprep.subr.mxu0 0.0
    %126 = vmatpush1.msra.mxu0 0.0
    %127 = vmatprep.subr.mxu0 0.0
    %128 = vmatpush1.msra.mxu0 0.0
    %129 = vmatprep.subr.mxu0 0.0
    %130 = vmatpush1.msra.mxu0 0.0
    %131 = vmatprep.subr.mxu0 0.0
    %132 = vmatpush1.msra.mxu0 0.0
    %133 = vmatprep.subr.mxu0 0.0
    %134 = vmatpush1.msra.mxu0 0.0
    %135 = vmatprep.subr.mxu0 0.0
    %136 = vmatpush1.msra.mxu0 0.0
    %137 = vmatprep.subr.mxu0 0.0
    %138 = vmatpush1.msra.mxu0 0.0
    %139 = vmatprep.subr.mxu0 0.0
    %140 = vmatpush1.msra.mxu0 0.0
    %141 = vmatprep.subr.mxu0 0.0
    %142 = vmatpush1.msra.mxu0 0.0
    %143 = vmatprep.subr.mxu0 0.0
    %144 = vmatpush1.msra.mxu0 0.0
    %145 = vmatprep.subr.mxu0 0.0
    %146 = vmatpush1.msra.mxu0 0.0
    %147 = vmatprep.subr.mxu0 0.0
    %148 = vmatpush1.msra.mxu0 0.0
    %149 = vmatprep.subr.mxu0 0.0
    %150 = vmatpush1.msra.mxu0 0.0
    %151 = vmatprep.subr.mxu0 0.0
    %152 = vmatpush1.msra.mxu0 0.0
    %153 = vmatprep.subr.mxu0 0.0
    %154 = vmatpush1.msra.mxu0 0.0
    %155 = vmatprep.subr.mxu0 0.0
    %156 = vmatpush1.msra.mxu0 0.0
    %157 = vmatprep.subr.mxu0 0.0
    %158 = vmatpush1.msra.mxu0 0.0
    %159 = vmatprep.subr.mxu0 0.0
    %160 = vmatpush1.msra.mxu0 0.0
    %161 = vmatprep.subr.mxu0 0.0
    %162 = vmatpush1.msra.mxu0 0.0
    %163 = vmatprep.subr.mxu0 0.0
    %164 = vmatpush1.msra.mxu0 0.0
    %165 = vmatprep.subr.mxu0 0.0
    %166 = vmatpush1.msra.mxu0 0.0
    %167 = vmatprep.subr.mxu0 0.0
    %168 = vmatpush1.msra.mxu0 0.0
    %169 = vmatprep.subr.mxu0 0.0
    %170 = vmatpush1.msra.mxu0 0.0
    %171 = vmatprep.subr.mxu0 0.0
    %172 = vmatpush1.msra.mxu0 0.0
    %173 = vmatprep.subr.mxu0 0.0
    %174 = vmatpush1.msra.mxu0 0.0
    %175 = vmatprep.subr.mxu0 0.0
    %176 = vmatpush1.msra.mxu0 0.0
    %177 = vmatprep.subr.mxu0 0.0
    %178 = vmatpush1.msra.mxu0 0.0
    %179 = vmatprep.subr.mxu0 0.0
    %180 = vmatpush1.msra.mxu0 0.0
    %181 = vmatprep.subr.mxu0 0.0
    %182 = vmatpush1.msra.mxu0 0.0
    %183 = vmatprep.mubr.f32.mxu0 0.0
    %184 = vmatmul.mubr.f32.gmra.mrb[0].mxu0 %v117
    %v185 = vpop.f32.mrb[0].mxu0
    %v186 = vadd.f32 %v112, %v185
    %v187 = vpop.f32.mrb[0].mxu0
    %188 = vdwg.mxu0
    %v189 = vld [vmem:[%s4] sm:$0x1]
    %v191 = vlaneseq
    %v192 = vshrl.u32 %v191, 7
    %v193 = vsub.s32 0, %v192
    %v194 = vrot.slane %v189, %v193
    %v196 = vadd.f32 %v186, %v194
    %v197 = vmax.f32 %v196, 0.0
    %v198 = vld [vmem:[%s5] sm:$0xff]
    %v199 = vld [vmem:[%s5 + $0x8] sm:$0xff]
    %v200 = vld [vmem:[%s5 + $0x10] sm:$0xff]
    %v201 = vld [vmem:[%s5 + $0x18] sm:$0xff]
    %v202 = vld [vmem:[%s5 + $0x20] sm:$0xff]
    %v203 = vld [vmem:[%s5 + $0x28] sm:$0xff]
    %v204 = vld [vmem:[%s5 + $0x30] sm:$0xff]
    %v205 = vld [vmem:[%s5 + $0x38] sm:$0xff]
    %v206 = vld [vmem:[%s5 + $0x40] sm:$0xff]
    %v207 = vld [vmem:[%s5 + $0x48] sm:$0xff]
    %v208 = vld [vmem:[%s5 + $0x50] sm:$0xff]
    %v209 = vld [vmem:[%s5 + $0x58] sm:$0xff]
    %v210 = vld [vmem:[%s5 + $0x60] sm:$0xff]
    %v211 = vld [vmem:[%s5 + $0x68] sm:$0xff]
    %v212 = vld [vmem:[%s5 + $0x70] sm:$0xff]
    %v213 = vld [vmem:[%s5 + $0x78] sm:$0xff]
    %v214 = vld [vmem:[%s6] sm:$0x1]
    %v216 = vlaneseq
    %v217 = vshrl.u32 %v216, 7
    %v218 = vsub.s32 0, %v217
    %v219 = vrot.slane %v214, %v218
    %221 = vmatprep.subr.mxu0 0.0
    %222 = vmatpush1.msra.mxu0 %v198
    %223 = vmatprep.subr.mxu0 0.0
    %224 = vmatpush1.msra.mxu0 %v199
    %225 = vmatprep.subr.mxu0 0.0
    %226 = vmatpush1.msra.mxu0 %v200
    %227 = vmatprep.subr.mxu0 0.0
    %228 = vmatpush1.msra.mxu0 %v201
    %229 = vmatprep.subr.mxu0 0.0
    %230 = vmatpush1.msra.mxu0 %v202
    %231 = vmatprep.subr.mxu0 0.0
    %232 = vmatpush1.msra.mxu0 %v203
    %233 = vmatprep.subr.mxu0 0.0
    %234 = vmatpush1.msra.mxu0 %v204
    %235 = vmatprep.subr.mxu0 0.0
    %236 = vmatpush1.msra.mxu0 %v205
    %237 = vmatprep.subr.mxu0 0.0
    %238 = vmatpush1.msra.mxu0 %v206
    %239 = vmatprep.subr.mxu0 0.0
    %240 = vmatpush1.msra.mxu0 %v207
    %241 = vmatprep.subr.mxu0 0.0
    %242 = vmatpush1.msra.mxu0 %v208
    %243 = vmatprep.subr.mxu0 0.0
    %244 = vmatpush1.msra.mxu0 %v209
    %245 = vmatprep.subr.mxu0 0.0
    %246 = vmatpush1.msra.mxu0 %v210
    %247 = vmatprep.subr.mxu0 0.0
    %248 = vmatpush1.msra.mxu0 %v211
    %249 = vmatprep.subr.mxu0 0.0
    %250 = vmatpush1.msra.mxu0 %v212
    %251 = vmatprep.subr.mxu0 0.0
    %252 = vmatpush1.msra.mxu0 %v213
    %253 = vmatprep.subr.mxu0 0.0
    %254 = vmatpush1.msra.mxu0 0.0
    %255 = vmatprep.subr.mxu0 0.0
    %256 = vmatpush1.msra.mxu0 0.0
    %257 = vmatprep.subr.mxu0 0.0
    %258 = vmatpush1.msra.mxu0 0.0
    %259 = vmatprep.subr.mxu0 0.0
    %260 = vmatpush1.msra.mxu0 0.0
    %261 = vmatprep.subr.mxu0 0.0
    %262 = vmatpush1.msra.mxu0 0.0
    %263 = vmatprep.subr.mxu0 0.0
    %264 = vmatpush1.msra.mxu0 0.0
    %265 = vmatprep.subr.mxu0 0.0
    %266 = vmatpush1.msra.mxu0 0.0
    %267 = vmatprep.subr.mxu0 0.0
    %268 = vmatpush1.msra.mxu0 0.0
    %269 = vmatprep.subr.mxu0 0.0
    %270 = vmatpush1.msra.mxu0 0.0
    %271 = vmatprep.subr.mxu0 0.0
    %272 = vmatpush1.msra.mxu0 0.0
    %273 = vmatprep.subr.mxu0 0.0
    %274 = vmatpush1.msra.mxu0 0.0
    %275 = vmatprep.subr.mxu0 0.0
    %276 = vmatpush1.msra.mxu0 0.0
    %277 = vmatprep.subr.mxu0 0.0
    %278 = vmatpush1.msra.mxu0 0.0
    %279 = vmatprep.subr.mxu0 0.0
    %280 = vmatpush1.msra.mxu0 0.0
    %281 = vmatprep.subr.mxu0 0.0
    %282 = vmatpush1.msra.mxu0 0.0
    %283 = vmatprep.subr.mxu0 0.0
    %284 = vmatpush1.msra.mxu0 0.0
    %285 = vmatprep.mubr.f32.mxu0 0.0
    %286 = vmatmul.mubr.f32.gmra.mrb[0].mxu0 %v197
    %v287 = vpop.f32.mrb[0].mxu0
    %v288 = vadd.f32 %v219, %v287
    %v289 = vpop.f32.mrb[0].mxu0
    %290 = vdwg.mxu0
    %v291 = vmax.f32 %v288, 0.0
    %v292 = vld [vmem:[%s7] sm:$0xff]
    %v293 = vld [vmem:[%s7 + $0x8] sm:$0xff]
    %v294 = vld [vmem:[%s7 + $0x10] sm:$0xff]
    %v295 = vld [vmem:[%s7 + $0x18] sm:$0xff]
    %v296 = vld [vmem:[%s7 + $0x20] sm:$0xff]
    %v297 = vld [vmem:[%s7 + $0x28] sm:$0xff]
    %v298 = vld [vmem:[%s7 + $0x30] sm:$0xff]
    %v299 = vld [vmem:[%s7 + $0x38] sm:$0xff]
    %v300 = vld [vmem:[%s7 + $0x40] sm:$0xff]
    %v301 = vld [vmem:[%s7 + $0x48] sm:$0xff]
    %v302 = vld [vmem:[%s7 + $0x50] sm:$0xff]
    %v303 = vld [vmem:[%s7 + $0x58] sm:$0xff]
    %v304 = vld [vmem:[%s7 + $0x60] sm:$0xff]
    %v305 = vld [vmem:[%s7 + $0x68] sm:$0xff]
    %v306 = vld [vmem:[%s7 + $0x70] sm:$0xff]
    %v307 = vld [vmem:[%s7 + $0x78] sm:$0xff]
    %v308 = vld [vmem:[%s8] sm:$0x1]
    %v310 = vlaneseq
    %v311 = vshrl.u32 %v310, 7
    %v312 = vsub.s32 0, %v311
    %v313 = vrot.slane %v308, %v312
    %315 = vmatprep.subr.mxu0 0.0
    %316 = vmatpush1.msra.mxu0 %v292
    %317 = vmatprep.subr.mxu0 0.0
    %318 = vmatpush1.msra.mxu0 %v293
    %319 = vmatprep.subr.mxu0 0.0
    %320 = vmatpush1.msra.mxu0 %v294
    %321 = vmatprep.subr.mxu0 0.0
    %322 = vmatpush1.msra.mxu0 %v295
    %323 = vmatprep.subr.mxu0 0.0
    %324 = vmatpush1.msra.mxu0 %v296
    %325 = vmatprep.subr.mxu0 0.0
    %326 = vmatpush1.msra.mxu0 %v297
    %327 = vmatprep.subr.mxu0 0.0
    %328 = vmatpush1.msra.mxu0 %v298
    %329 = vmatprep.subr.mxu0 0.0
    %330 = vmatpush1.msra.mxu0 %v299
    %331 = vmatprep.subr.mxu0 0.0
    %332 = vmatpush1.msra.mxu0 %v300
    %333 = vmatprep.subr.mxu0 0.0
    %334 = vmatpush1.msra.mxu0 %v301
    %335 = vmatprep.subr.mxu0 0.0
    %336 = vmatpush1.msra.mxu0 %v302
    %337 = vmatprep.subr.mxu0 0.0
    %338 = vmatpush1.msra.mxu0 %v303
    %339 = vmatprep.subr.mxu0 0.0
    %340 = vmatpush1.msra.mxu0 %v304
    %341 = vmatprep.subr.mxu0 0.0
    %342 = vmatpush1.msra.mxu0 %v305
    %343 = vmatprep.subr.mxu0 0.0
    %344 = vmatpush1.msra.mxu0 %v306
    %345 = vmatprep.subr.mxu0 0.0
    %346 = vmatpush1.msra.mxu0 %v307
    %347 = vmatprep.subr.mxu0 0.0
    %348 = vmatpush1.msra.mxu0 0.0
    %349 = vmatprep.subr.mxu0 0.0
    %350 = vmatpush1.msra.mxu0 0.0
    %351 = vmatprep.subr.mxu0 0.0
    %352 = vmatpush1.msra.mxu0 0.0
    %353 = vmatprep.subr.mxu0 0.0
    %354 = vmatpush1.msra.mxu0 0.0
    %355 = vmatprep.subr.mxu0 0.0
    %356 = vmatpush1.msra.mxu0 0.0
    %357 = vmatprep.subr.mxu0 0.0
    %358 = vmatpush1.msra.mxu0 0.0
    %359 = vmatprep.subr.mxu0 0.0
    %360 = vmatpush1.msra.mxu0 0.0
    %361 = vmatprep.subr.mxu0 0.0
    %362 = vmatpush1.msra.mxu0 0.0
    %363 = vmatprep.subr.mxu0 0.0
    %364 = vmatpush1.msra.mxu0 0.0
    %365 = vmatprep.subr.mxu0 0.0
    %366 = vmatpush1.msra.mxu0 0.0
    %367 = vmatprep.subr.mxu0 0.0
    %368 = vmatpush1.msra.mxu0 0.0
    %369 = vmatprep.subr.mxu0 0.0
    %370 = vmatpush1.msra.mxu0 0.0
    %371 = vmatprep.subr.mxu0 0.0
    %372 = vmatpush1.msra.mxu0 0.0
    %373 = vmatprep.subr.mxu0 0.0
    %374 = vmatpush1.msra.mxu0 0.0
    %375 = vmatprep.subr.mxu0 0.0
    %376 = vmatpush1.msra.mxu0 0.0
    %377 = vmatprep.subr.mxu0 0.0
    %378 = vmatpush1.msra.mxu0 0.0
    %379 = vmatprep.mubr.f32.mxu0 0.0
    %380 = vmatmul.mubr.f32.gmra.mrb[0].mxu0 %v291
    %v381 = vpop.f32.mrb[0].mxu0
    %v382 = vadd.f32 %v313, %v381
    %v383 = vpop.f32.mrb[0].mxu0
    %384 = vdwg.mxu0
    %385 = vst.msk [vmem:[#allocation2] sm:$0xff] %vm115, %v382
    // Predicated region
    $region38: #{system_network_forward.1} parent=1 // pred_check
      _
    $region39: #{system_network_forward.1} parent=1 // pred_check_branch
      %387 = sbr.rel (0) target = $region41
    $region40: #{system_network_forward.1} parent=1 // pred_region
      %s389 = ssub.s32 128, 128
      %390 = vsyncadd [#allocation3], %s389
      %s392 = sshll.u32 [#allocation2], 4
      %s393 = int_to_ptr.vmem [resolvable:$true] %s392
      %395 = dma.vmem_to_hbm [thread:$0]  %s393, 128, %s9, [#allocation3]
    $region41: #{system_network_forward.1} parent=1 // pred_fallthru
      _
    // Predicated region
    $region42: #{system_network_forward.1} parent=1 // pred_check
      _
    $region43: #{system_network_forward.1} parent=1 // pred_check_branch
      %397 = sbr.rel (0) target = $region45
    $region44: #{system_network_forward.1} parent=1 // pred_region
      %398 = dma.done [#allocation3], 128
    $region45: #{system_network_forward.1} parent=1 // pred_fallthru
      _
    %399 = vsyncpa [#allocation3], 1

</llo_original>
